<compile_context>
chip_gen: v5e
topology: v5e:2x2
jax: 0.10.0
libtpu: 0.0.40
codegen_flags: <defaults>
</compile_context>

<pallas_src>
import jax
import jax.numpy as jnp
from jax.experimental import pallas as pl
from jax.experimental.pallas import tpu as pltpu

P_DROP = 0.7
KEEP_SCALE = 1.0 / (1.0 - P_DROP)
# keep iff bits >= threshold  =>  P(keep) = 1 - P_DROP
DROP_THRESHOLD = min(int(round(P_DROP * 2.0 ** 32)), 2 ** 32 - 1)


def _attn_dropout_kernel(bits_ref, x1_ref, x2_ref, o_ref):
    x1 = x1_ref[...]  # (Bt, S, D)
    x2 = x2_ref[...]  # (Bt, S, D)

    # v1 = x1 @ x2^T  — transpose absorbed by contracting the last axes (MXU).
    v1 = jnp.einsum("bqd,bkd->bqk", x1, x2, preferred_element_type=jnp.float32)

    # softmax(v1, axis=-1), with the dropout keep-scale folded into the
    # normalization so the (B,S,S) plane sees a single multiply.
    m = jnp.max(v1, axis=-1, keepdims=True)
    e = jnp.exp(v1 - m)
    row_sum = jnp.sum(e, axis=-1, keepdims=True)
    inv = KEEP_SCALE / row_sum                      # (Bt, S, 1): tiny divide

    # dropout(p=0.7): integer threshold on raw uint32 bits (P(keep) = 0.3).
    keep = bits_ref[...] >= jnp.uint32(DROP_THRESHOLD)
    v4 = jnp.where(keep, e * inv, 0.0)

    # v5 = v4 @ v1  (pre-softmax scores, exactly as the PyTorch spec does).
    v5 = jnp.einsum("bqk,bkn->bqn", v4, v1, preferred_element_type=jnp.float32)
    o_ref[...] = v5.astype(o_ref.dtype)


def _pick_batch_tile(B, S, D, budget_bytes=12 * 1024 * 1024):
    """Largest batch tile dividing B whose per-step working set fits a
    conservative VMEM budget (safe on v5e's small default scoped VMEM and
    v7x's 64 MiB physical VMEM)."""
    per_b = 4 * (2 * S * D + 2 * S * S)   # resident tiles: x1, x2, bits, out
    per_b += 4 * 3 * S * S                # f32 intermediates: v1, e, v4
    bt = max(1, min(B, budget_bytes // max(per_b, 1)))
    while B % bt:
        bt -= 1
    return bt


def model_forward(x1, x2, dropout_key):
    """x1, x2: (B, S, D) float32.  Returns (B, S, S) float32."""
    B, S, D = x1.shape
    assert x2.shape == (B, S, D), "x2 must match x1 so that v4 @ v1 is valid"

    # Dropout bits generated outside the kernel (portable: works on TPU and in
    # interpret mode, unlike pltpu.prng_*).
    bits = jax.random.bits(dropout_key, (B, S, S), dtype=jnp.uint32)

    Bt = _pick_batch_tile(B, S, D)
    grid = (B // Bt,)

    flops = 2 * B * S * S * D + 2 * B * S * S * S
    bytes_accessed = 4 * (2 * B * S * D + 2 * B * S * S)

    return pl.pallas_call(
        _attn_dropout_kernel,
        out_shape=jax.ShapeDtypeStruct((B, S, S), jnp.float32),
        grid=grid,
        in_specs=[
            pl.BlockSpec((Bt, S, S), lambda i: (i, 0, 0)),   # dropout bits
            pl.BlockSpec((Bt, S, D), lambda i: (i, 0, 0)),   # x1
            pl.BlockSpec((Bt, S, D), lambda i: (i, 0, 0)),   # x2
        ],
        out_specs=pl.BlockSpec((Bt, S, S), lambda i: (i, 0, 0)),
        compiler_params=pltpu.CompilerParams(
            # Batch tiles are independent -> shard across v7x's 2 TensorCores.
            dimension_semantics=("parallel",),
        ),
        cost_estimate=pl.CostEstimate(
            flops=flops,
            transcendentals=B * S * S,
            bytes_accessed=bytes_accessed,
        ),
    )(bits, x1, x2)


if __name__ == "__main__":
    # Small, consistent shapes: batch=2, seq=128, hidden=32.
    B, S, D = 2, 128, 32
    key = jax.random.PRNGKey(0)
    k1, k2, kd = jax.random.split(key, 3)
    x1 = jax.random.normal(k1, (B, S, D), dtype=jnp.float32)
    x2 = jax.random.normal(k2, (B, S, D), dtype=jnp.float32)

    out = model_forward(x1, x2, kd)
    out = jax.block_until_ready(out)

    assert out.shape == (B, S, S)
    assert bool(jnp.all(jnp.isfinite(out)))
    print("KERNEL_OK")
</pallas_src>

<mosaic_0001>
module attributes {stable_mosaic.version = 11 : i64} {
  func.func @_attn_dropout_kernel(%arg0: i32, %arg1: memref<2x128x128xi32, #tpu.memory_space<vmem>>, %arg2: memref<2x128x32xf32, #tpu.memory_space<vmem>>, %arg3: memref<2x128x32xf32, #tpu.memory_space<vmem>>, %arg4: memref<2x128x128xf32, #tpu.memory_space<vmem>>) attributes {dimension_semantics = [#tpu.dimension_semantics<parallel>], iteration_bounds = array<i64: 1>, scalar_prefetch = 0 : i64, scratch_operands = 0 : i64, tpu.core_type = #tpu.core_type<tc>, window_params = [{transform_indices = @transform_0, window_bounds = array<i64: 2, 128, 128>}, {transform_indices = @transform_1, window_bounds = array<i64: 2, 128, 32>}, {transform_indices = @transform_2, window_bounds = array<i64: 2, 128, 32>}, {transform_indices = @transform_3, window_bounds = array<i64: 2, 128, 128>}]} {
    %c0 = arith.constant 0 : index
    %c0_0 = arith.constant 0 : index
    %c0_1 = arith.constant 0 : index
    %0 = vector.load %arg2[%c0, %c0_0, %c0_1] : memref<2x128x32xf32, #tpu.memory_space<vmem>>, vector<2x128x32xf32>
    %c0_2 = arith.constant 0 : index
    %c0_3 = arith.constant 0 : index
    %c0_4 = arith.constant 0 : index
    %1 = vector.load %arg3[%c0_2, %c0_3, %c0_4] : memref<2x128x32xf32, #tpu.memory_space<vmem>>, vector<2x128x32xf32>
    "tpu.trace_start"() <{level = 10 : i32, message = "bqd,bkd->bqk"}> : () -> ()
    %cst = arith.constant dense<0.000000e+00> : vector<2x128x128xf32>
    %2 = tpu.matmul %0, %1, %cst {dimension_numbers = #tpu.dot_dimension_numbers<[2], [2], [1], [1], [0, 0, 0, 1, 1, 1], [0], [0]>} : vector<2x128x32xf32>, vector<2x128x32xf32>, vector<2x128x128xf32> -> vector<2x128x128xf32>
    "tpu.trace_stop"() : () -> ()
    %cst_5 = arith.constant dense<0xFF800000> : vector<2x128xf32>
    %3 = vector.multi_reduction <maximumf>, %2, %cst_5 [2] : vector<2x128x128xf32> to vector<2x128xf32>
    %4 = vector.shape_cast %3 : vector<2x128xf32> to vector<2x128x1xf32>
    %5 = vector.broadcast %4 : vector<2x128x1xf32> to vector<2x128x128xf32>
    %6 = arith.subf %2, %5 : vector<2x128x128xf32>
    %7 = math.exp %6 : vector<2x128x128xf32>
    %cst_6 = arith.constant dense<0.000000e+00> : vector<2x128xf32>
    %8 = vector.multi_reduction <add>, %7, %cst_6 [2] : vector<2x128x128xf32> to vector<2x128xf32>
    %9 = vector.shape_cast %8 : vector<2x128xf32> to vector<2x128x1xf32>
    %cst_7 = arith.constant 3.33333325 : f32
    %10 = vector.broadcast %cst_7 : f32 to vector<2x128x1xf32>
    %11 = arith.divf %10, %9 : vector<2x128x1xf32>
    %c0_8 = arith.constant 0 : index
    %c0_9 = arith.constant 0 : index
    %c0_10 = arith.constant 0 : index
    %12 = vector.load %arg1[%c0_8, %c0_9, %c0_10] : memref<2x128x128xi32, #tpu.memory_space<vmem>>, vector<2x128x128xi32>
    %c-1288490189_i32 = arith.constant -1288490189 : i32
    %13 = vector.broadcast %c-1288490189_i32 : i32 to vector<2x128x128xi32>
    %14 = arith.cmpi uge, %12, %13 : vector<2x128x128xi32>
    %15 = vector.broadcast %11 : vector<2x128x1xf32> to vector<2x128x128xf32>
    %16 = arith.mulf %7, %15 : vector<2x128x128xf32>
    %cst_11 = arith.constant 0.000000e+00 : f32
    %17 = vector.broadcast %cst_11 : f32 to vector<2x128x128xf32>
    %18 = arith.select %14, %16, %17 : vector<2x128x128xi1>, vector<2x128x128xf32>
    "tpu.trace_start"() <{level = 10 : i32, message = "bqk,bkn->bqn"}> : () -> ()
    %cst_12 = arith.constant dense<0.000000e+00> : vector<2x128x128xf32>
    %19 = tpu.matmul %18, %2, %cst_12 {dimension_numbers = #tpu.dot_dimension_numbers<[2], [1], [1], [2], [0, 0, 0, 1, 1, 2], [0], [0]>} : vector<2x128x128xf32>, vector<2x128x128xf32>, vector<2x128x128xf32> -> vector<2x128x128xf32>
    "tpu.trace_stop"() : () -> ()
    %c0_13 = arith.constant 0 : index
    %c0_14 = arith.constant 0 : index
    %c0_15 = arith.constant 0 : index
    %20 = vector.load %arg4[%c0_13, %c0_14, %c0_15] : memref<2x128x128xf32, #tpu.memory_space<vmem>>, vector<2x128x128xf32>
    tpu.vector_store %arg4[%c0_13, %c0_14, %c0_15], %19 {strides = array<i32>} : memref<2x128x128xf32, #tpu.memory_space<vmem>>, vector<2x128x128xf32>,
    return
  }
  func.func @transform_0(%arg0: i32) -> (i32, i32, i32) {
    %c0_i32 = arith.constant 0 : i32
    %c0_i32_0 = arith.constant 0 : i32
    %c0_i32_1 = arith.constant 0 : i32
    return %arg0, %c0_i32, %c0_i32_0 : i32, i32, i32
  }
  func.func @transform_1(%arg0: i32) -> (i32, i32, i32) {
    %c0_i32 = arith.constant 0 : i32
    %c0_i32_0 = arith.constant 0 : i32
    %c0_i32_1 = arith.constant 0 : i32
    return %arg0, %c0_i32, %c0_i32_0 : i32, i32, i32
  }
  func.func @transform_2(%arg0: i32) -> (i32, i32, i32) {
    %c0_i32 = arith.constant 0 : i32
    %c0_i32_0 = arith.constant 0 : i32
    %c0_i32_1 = arith.constant 0 : i32
    return %arg0, %c0_i32, %c0_i32_0 : i32, i32, i32
  }
  func.func @transform_3(%arg0: i32) -> (i32, i32, i32) {
    %c0_i32 = arith.constant 0 : i32
    %c0_i32_0 = arith.constant 0 : i32
    %c0_i32_1 = arith.constant 0 : i32
    return %arg0, %c0_i32, %c0_i32_0 : i32, i32, i32
  }
}

</mosaic_0001>

<llo_original>
// kernel: tpu_custom_call.1
$region0: #{tpu_custom_call.1}
  #allocation0 [shape = 'u32[]', space=smem, size = 0x4, offset = 0x4, fixed_abs, tag = 'smem constant byte address 0x4 - core index']
  #allocation1 [shape = 'u32[72,128]{1,0:T(1,128)}', space=vmem, size = 0x9000, scoped, tag = 'internal scratch']
  %s0 = inlined_call_operand.vmem [shape: u32[2,128,128], index: 0, kind: input, shape index: {}]
  %s1 = inlined_call_operand.vmem [shape: f32[2,128,32], index: 1, kind: input, shape index: {}]
  %s2 = inlined_call_operand.vmem [shape: f32[2,128,32], index: 2, kind: input, shape index: {}]
  %s3 = inlined_call_operand.hbm [shape: f32[2,128,128], index: 3, kind: output, shape index: {}]
  %s4 = sld [smem:[#allocation0]]
  $region22: #{tpu_custom_call.1} parent=0
    _
  %s6 = ssub.s32 1, %s4
  %s7 = scalar_select 0, %s6, %s4
  $region1: #{tpu_custom_call.1} parent=0
    #allocation2 [shape = 'u8[131072]{0}', space=vmem, size = 0x20000, scoped, tag = 'output window, operand 0, single buffered']
    #allocation3 [shape = 's32[1]{0}', space=sflag, size = 0x4, scoped, tag = 'scoped memory for tpu_custom_call.1']
    %8 = vsyncpa [#allocation3], 0
    // Predicated region
    $region2: #{tpu_custom_call.1} parent=1 // pred_check
      _
    $region3: #{tpu_custom_call.1} parent=1 // pred_check_branch
      %10 = sbr.rel (0) target = $region5
    $region4: #{tpu_custom_call.1} parent=1 // pred_region
      _
    $region5: #{tpu_custom_call.1} parent=1 // pred_fallthru
      _
    // Predicated region
    $region6: #{tpu_custom_call.1} parent=1 // pred_check
      _
    $region7: #{tpu_custom_call.1} parent=1 // pred_check_branch
      %12 = sbr.rel (0) target = $region9
    $region8: #{tpu_custom_call.1} parent=1 // pred_region
      _
    $region9: #{tpu_custom_call.1} parent=1 // pred_fallthru
      _
    // Predicated region
    $region10: #{tpu_custom_call.1} parent=1 // pred_check
      _
    $region11: #{tpu_custom_call.1} parent=1 // pred_check_branch
      %14 = sbr.rel (0) target = $region13
    $region12: #{tpu_custom_call.1} parent=1 // pred_region
      _
    $region13: #{tpu_custom_call.1} parent=1 // pred_fallthru
      _
    %v15 = vld [vmem:[%s1] sm:$0xff]
    %v16 = vld [vmem:[%s1 + $0x8] sm:$0xff]
    %v17 = vld [vmem:[%s1 + $0x10] sm:$0xff]
    %v18 = vld [vmem:[%s1 + $0x18] sm:$0xff]
    %v19 = vld [vmem:[%s1 + $0x20] sm:$0xff]
    %v20 = vld [vmem:[%s1 + $0x28] sm:$0xff]
    %v21 = vld [vmem:[%s1 + $0x30] sm:$0xff]
    %v22 = vld [vmem:[%s1 + $0x38] sm:$0xff]
    %v23 = vld [vmem:[%s1 + $0x40] sm:$0xff]
    %v24 = vld [vmem:[%s1 + $0x48] sm:$0xff]
    %v25 = vld [vmem:[%s1 + $0x50] sm:$0xff]
    %v26 = vld [vmem:[%s1 + $0x58] sm:$0xff]
    %v27 = vld [vmem:[%s1 + $0x60] sm:$0xff]
    %v28 = vld [vmem:[%s1 + $0x68] sm:$0xff]
    %v29 = vld [vmem:[%s1 + $0x70] sm:$0xff]
    %v30 = vld [vmem:[%s1 + $0x78] sm:$0xff]
    %v31 = vld [vmem:[%s1 + $0x80] sm:$0xff]
    %v32 = vld [vmem:[%s1 + $0x88] sm:$0xff]
    %v33 = vld [vmem:[%s1 + $0x90] sm:$0xff]
    %v34 = vld [vmem:[%s1 + $0x98] sm:$0xff]
    %v35 = vld [vmem:[%s1 + $0xa0] sm:$0xff]
    %v36 = vld [vmem:[%s1 + $0xa8] sm:$0xff]
    %v37 = vld [vmem:[%s1 + $0xb0] sm:$0xff]
    %v38 = vld [vmem:[%s1 + $0xb8] sm:$0xff]
    %v39 = vld [vmem:[%s1 + $0xc0] sm:$0xff]
    %v40 = vld [vmem:[%s1 + $0xc8] sm:$0xff]
    %v41 = vld [vmem:[%s1 + $0xd0] sm:$0xff]
    %v42 = vld [vmem:[%s1 + $0xd8] sm:$0xff]
    %v43 = vld [vmem:[%s1 + $0xe0] sm:$0xff]
    %v44 = vld [vmem:[%s1 + $0xe8] sm:$0xff]
    %v45 = vld [vmem:[%s1 + $0xf0] sm:$0xff]
    %v46 = vld [vmem:[%s1 + $0xf8] sm:$0xff]
    %v47 = vld [vmem:[%s2] sm:$0xff]
    %v48 = vld [vmem:[%s2 + $0x8] sm:$0xff]
    %v49 = vld [vmem:[%s2 + $0x10] sm:$0xff]
    %v50 = vld [vmem:[%s2 + $0x18] sm:$0xff]
    %v51 = vld [vmem:[%s2 + $0x20] sm:$0xff]
    %v52 = vld [vmem:[%s2 + $0x28] sm:$0xff]
    %v53 = vld [vmem:[%s2 + $0x30] sm:$0xff]
    %v54 = vld [vmem:[%s2 + $0x38] sm:$0xff]
    %v55 = vld [vmem:[%s2 + $0x40] sm:$0xff]
    %v56 = vld [vmem:[%s2 + $0x48] sm:$0xff]
    %v57 = vld [vmem:[%s2 + $0x50] sm:$0xff]
    %v58 = vld [vmem:[%s2 + $0x58] sm:$0xff]
    %v59 = vld [vmem:[%s2 + $0x60] sm:$0xff]
    %v60 = vld [vmem:[%s2 + $0x68] sm:$0xff]
    %v61 = vld [vmem:[%s2 + $0x70] sm:$0xff]
    %v62 = vld [vmem:[%s2 + $0x78] sm:$0xff]
    %v63 = vld [vmem:[%s2 + $0x80] sm:$0xff]
    %v64 = vld [vmem:[%s2 + $0x88] sm:$0xff]
    %v65 = vld [vmem:[%s2 + $0x90] sm:$0xff]
    %v66 = vld [vmem:[%s2 + $0x98] sm:$0xff]
    %v67 = vld [vmem:[%s2 + $0xa0] sm:$0xff]
    %v68 = vld [vmem:[%s2 + $0xa8] sm:$0xff]
    %v69 = vld [vmem:[%s2 + $0xb0] sm:$0xff]
    %v70 = vld [vmem:[%s2 + $0xb8] sm:$0xff]
    %v71 = vld [vmem:[%s2 + $0xc0] sm:$0xff]
    %v72 = vld [vmem:[%s2 + $0xc8] sm:$0xff]
    %v73 = vld [vmem:[%s2 + $0xd0] sm:$0xff]
    %v74 = vld [vmem:[%s2 + $0xd8] sm:$0xff]
    %v75 = vld [vmem:[%s2 + $0xe0] sm:$0xff]
    %v76 = vld [vmem:[%s2 + $0xe8] sm:$0xff]
    %v77 = vld [vmem:[%s2 + $0xf0] sm:$0xff]
    %v78 = vld [vmem:[%s2 + $0xf8] sm:$0xff]
    %vm79 = vcmask 261120
    %v81 = vsel %vm79, %v15, 0
    %v84 = vsel %vm79, %v16, 0
    %v87 = vsel %vm79, %v17, 0
    %v90 = vsel %vm79, %v18, 0
    %v93 = vsel %vm79, %v19, 0
    %v96 = vsel %vm79, %v20, 0
    %v99 = vsel %vm79, %v21, 0
    %v102 = vsel %vm79, %v22, 0
    %v105 = vsel %vm79, %v23, 0
    %v108 = vsel %vm79, %v24, 0
    %v111 = vsel %vm79, %v25, 0
    %v114 = vsel %vm79, %v26, 0
    %v117 = vsel %vm79, %v27, 0
    %v120 = vsel %vm79, %v28, 0
    %v123 = vsel %vm79, %v29, 0
    %v126 = vsel %vm79, %v30, 0
    %v129 = vsel %vm79, %v47, 0
    %v132 = vsel %vm79, %v48, 0
    %v135 = vsel %vm79, %v49, 0
    %v138 = vsel %vm79, %v50, 0
    %v141 = vsel %vm79, %v51, 0
    %v144 = vsel %vm79, %v52, 0
    %v147 = vsel %vm79, %v53, 0
    %v150 = vsel %vm79, %v54, 0
    %v153 = vsel %vm79, %v55, 0
    %v156 = vsel %vm79, %v56, 0
    %v159 = vsel %vm79, %v57, 0
    %v162 = vsel %vm79, %v58, 0
    %v165 = vsel %vm79, %v59, 0
    %v168 = vsel %vm79, %v60, 0
    %v171 = vsel %vm79, %v61, 0
    %v174 = vsel %vm79, %v62, 0
    %176 = vmatpush.xpose.msra.mxu0 %v174
    %177 = vmatpush.xpose.msra.mxu0 %v171
    %178 = vmatpush.xpose.msra.mxu0 %v168
    %179 = vmatpush.xpose.msra.mxu0 %v165
    %180 = vmatpush.xpose.msra.mxu0 %v162
    %181 = vmatpush.xpose.msra.mxu0 %v159
    %182 = vmatpush.xpose.msra.mxu0 %v156
    %183 = vmatpush.xpose.msra.mxu0 %v153
    %184 = vmatpush.xpose.msra.mxu0 %v150
    %185 = vmatpush.xpose.msra.mxu0 %v147
    %186 = vmatpush.xpose.msra.mxu0 %v144
    %187 = vmatpush.xpose.msra.mxu0 %v141
    %188 = vmatpush.xpose.msra.mxu0 %v138
    %189 = vmatpush.xpose.msra.mxu0 %v135
    %190 = vmatpush.xpose.msra.mxu0 %v132
    %191 = vmatpush.xpose.msra.mxu0 %v129
    %192 = vmatmul.f32.gmra.mxu0 %v81
    %v193 = vpop.f32.mrf.mxu0
    %v194 = vadd.f32 0.0, %v193
    %195 = vmatmul.f32.gmra.mxu0 %v84
    %v196 = vpop.f32.mrf.mxu0
    %v197 = vadd.f32 0.0, %v196
    %198 = vmatmul.f32.gmra.mxu0 %v87
    %v199 = vpop.f32.mrf.mxu0
    %v200 = vadd.f32 0.0, %v199
    %201 = vmatmul.f32.gmra.mxu0 %v90
    %v202 = vpop.f32.mrf.mxu0
    %v203 = vadd.f32 0.0, %v202
    %204 = vmatmul.f32.gmra.mxu0 %v93
    %v205 = vpop.f32.mrf.mxu0
    %v206 = vadd.f32 0.0, %v205
    %207 = vmatmul.f32.gmra.mxu0 %v96
    %v208 = vpop.f32.mrf.mxu0
    %v209 = vadd.f32 0.0, %v208
    %210 = vmatmul.f32.gmra.mxu0 %v99
    %v211 = vpop.f32.mrf.mxu0
    %v212 = vadd.f32 0.0, %v211
    %213 = vmatmul.f32.gmra.mxu0 %v102
    %v214 = vpop.f32.mrf.mxu0
    %v215 = vadd.f32 0.0, %v214
    %216 = vmatmul.f32.gmra.mxu0 %v105
    %v217 = vpop.f32.mrf.mxu0
    %v218 = vadd.f32 0.0, %v217
    %219 = vmatmul.f32.gmra.mxu0 %v108
    %v220 = vpop.f32.mrf.mxu0
    %v221 = vadd.f32 0.0, %v220
    %222 = vmatmul.f32.gmra.mxu0 %v111
    %v223 = vpop.f32.mrf.mxu0
    %v224 = vadd.f32 0.0, %v223
    %225 = vmatmul.f32.gmra.mxu0 %v114
    %v226 = vpop.f32.mrf.mxu0
    %v227 = vadd.f32 0.0, %v226
    %228 = vmatmul.f32.gmra.mxu0 %v117
    %v229 = vpop.f32.mrf.mxu0
    %v230 = vadd.f32 0.0, %v229
    %231 = vmatmul.f32.gmra.mxu0 %v120
    %v232 = vpop.f32.mrf.mxu0
    %v233 = vadd.f32 0.0, %v232
    %234 = vmatmul.f32.gmra.mxu0 %v123
    %v235 = vpop.f32.mrf.mxu0
    %v236 = vadd.f32 0.0, %v235
    %237 = vmatmul.f32.gmra.mxu0 %v126
    %v238 = vpop.f32.mrf.mxu0
    %v239 = vadd.f32 0.0, %v238
    %240 = vdwg.mxu0
    %v242 = vsel %vm79, %v31, 0
    %v245 = vsel %vm79, %v32, 0
    %v248 = vsel %vm79, %v33, 0
    %v251 = vsel %vm79, %v34, 0
    %v254 = vsel %vm79, %v35, 0
    %v257 = vsel %vm79, %v36, 0
    %v260 = vsel %vm79, %v37, 0
    %v263 = vsel %vm79, %v38, 0
    %v266 = vsel %vm79, %v39, 0
    %v269 = vsel %vm79, %v40, 0
    %v272 = vsel %vm79, %v41, 0
    %v275 = vsel %vm79, %v42, 0
    %v278 = vsel %vm79, %v43, 0
    %v281 = vsel %vm79, %v44, 0
    %v284 = vsel %vm79, %v45, 0
    %v287 = vsel %vm79, %v46, 0
    %v290 = vsel %vm79, %v63, 0
    %v293 = vsel %vm79, %v64, 0
    %v296 = vsel %vm79, %v65, 0
    %v299 = vsel %vm79, %v66, 0
    %v302 = vsel %vm79, %v67, 0
    %v305 = vsel %vm79, %v68, 0
    %v308 = vsel %vm79, %v69, 0
    %v311 = vsel %vm79, %v70, 0
    %v314 = vsel %vm79, %v71, 0
    %v317 = vsel %vm79, %v72, 0
    %v320 = vsel %vm79, %v73, 0
    %v323 = vsel %vm79, %v74, 0
    %v326 = vsel %vm79, %v75, 0
    %v329 = vsel %vm79, %v76, 0
    %v332 = vsel %vm79, %v77, 0
    %v335 = vsel %vm79, %v78, 0
    %337 = vmatpush.xpose.msra.mxu0 %v335
    %338 = vmatpush.xpose.msra.mxu0 %v332
    %339 = vmatpush.xpose.msra.mxu0 %v329
    %340 = vmatpush.xpose.msra.mxu0 %v326
    %341 = vmatpush.xpose.msra.mxu0 %v323
    %342 = vmatpush.xpose.msra.mxu0 %v320
    %343 = vmatpush.xpose.msra.mxu0 %v317
    %344 = vmatpush.xpose.msra.mxu0 %v314
    %345 = vmatpush.xpose.msra.mxu0 %v311
    %346 = vmatpush.xpose.msra.mxu0 %v308
    %347 = vmatpush.xpose.msra.mxu0 %v305
    %348 = vmatpush.xpose.msra.mxu0 %v302
    %349 = vmatpush.xpose.msra.mxu0 %v299
    %350 = vmatpush.xpose.msra.mxu0 %v296
    %351 = vmatpush.xpose.msra.mxu0 %v293
    %352 = vmatpush.xpose.msra.mxu0 %v290
    %353 = vmatmul.f32.gmra.mxu0 %v242
    %v354 = vpop.f32.mrf.mxu0
    %v355 = vadd.f32 0.0, %v354
    %356 = vmatmul.f32.gmra.mxu0 %v245
    %v357 = vpop.f32.mrf.mxu0
    %v358 = vadd.f32 0.0, %v357
    %359 = vmatmul.f32.gmra.mxu0 %v248
    %v360 = vpop.f32.mrf.mxu0
    %v361 = vadd.f32 0.0, %v360
    %362 = vmatmul.f32.gmra.mxu0 %v251
    %v363 = vpop.f32.mrf.mxu0
    %v364 = vadd.f32 0.0, %v363
    %365 = vmatmul.f32.gmra.mxu0 %v254
    %v366 = vpop.f32.mrf.mxu0
    %v367 = vadd.f32 0.0, %v366
    %368 = vmatmul.f32.gmra.mxu0 %v257
    %v369 = vpop.f32.mrf.mxu0
    %v370 = vadd.f32 0.0, %v369
    %371 = vmatmul.f32.gmra.mxu0 %v260
    %v372 = vpop.f32.mrf.mxu0
    %v373 = vadd.f32 0.0, %v372
    %374 = vmatmul.f32.gmra.mxu0 %v263
    %v375 = vpop.f32.mrf.mxu0
    %v376 = vadd.f32 0.0, %v375
    %377 = vmatmul.f32.gmra.mxu0 %v266
    %v378 = vpop.f32.mrf.mxu0
    %v379 = vadd.f32 0.0, %v378
    %380 = vmatmul.f32.gmra.mxu0 %v269
    %v381 = vpop.f32.mrf.mxu0
    %v382 = vadd.f32 0.0, %v381
    %383 = vmatmul.f32.gmra.mxu0 %v272
    %v384 = vpop.f32.mrf.mxu0
    %v385 = vadd.f32 0.0, %v384
    %386 = vmatmul.f32.gmra.mxu0 %v275
    %v387 = vpop.f32.mrf.mxu0
    %v388 = vadd.f32 0.0, %v387
    %389 = vmatmul.f32.gmra.mxu0 %v278
    %v390 = vpop.f32.mrf.mxu0
    %v391 = vadd.f32 0.0, %v390
    %392 = vmatmul.f32.gmra.mxu0 %v281
    %v393 = vpop.f32.mrf.mxu0
    %v394 = vadd.f32 0.0, %v393
    %395 = vmatmul.f32.gmra.mxu0 %v284
    %v396 = vpop.f32.mrf.mxu0
    %v397 = vadd.f32 0.0, %v396
    %398 = vmatmul.f32.gmra.mxu0 %v287
    %v399 = vpop.f32.mrf.mxu0
    %v400 = vadd.f32 0.0, %v399
    %401 = vdwg.mxu0
    %402 = vmax.xlane.f32.xlu0 %v194
    %v403 = vpop.xlane.xlu0 %402
    %404 = vmax.xlane.f32.xlu0 %v197
    %v405 = vpop.xlane.xlu0 %404
    %406 = vmax.xlane.f32.xlu0 %v200
    %v407 = vpop.xlane.xlu0 %406
    %408 = vmax.xlane.f32.xlu0 %v203
    %v409 = vpop.xlane.xlu0 %408
    %410 = vmax.xlane.f32.xlu0 %v206
    %v411 = vpop.xlane.xlu0 %410
    %412 = vmax.xlane.f32.xlu0 %v209
    %v413 = vpop.xlane.xlu0 %412
    %414 = vmax.xlane.f32.xlu0 %v212
    %v415 = vpop.xlane.xlu0 %414
    %416 = vmax.xlane.f32.xlu0 %v215
    %v417 = vpop.xlane.xlu0 %416
    %418 = vmax.xlane.f32.xlu0 %v218
    %v419 = vpop.xlane.xlu0 %418
    %420 = vmax.xlane.f32.xlu0 %v221
    %v421 = vpop.xlane.xlu0 %420
    %422 = vmax.xlane.f32.xlu0 %v224
    %v423 = vpop.xlane.xlu0 %422
    %424 = vmax.xlane.f32.xlu0 %v227
    %v425 = vpop.xlane.xlu0 %424
    %426 = vmax.xlane.f32.xlu0 %v230
    %v427 = vpop.xlane.xlu0 %426
    %428 = vmax.xlane.f32.xlu0 %v233
    %v429 = vpop.xlane.xlu0 %428
    %430 = vmax.xlane.f32.xlu0 %v236
    %v431 = vpop.xlane.xlu0 %430
    %432 = vmax.xlane.f32.xlu0 %v239
    %v433 = vpop.xlane.xlu0 %432
    %434 = vmax.xlane.f32.xlu0 %v355
    %v435 = vpop.xlane.xlu0 %434
    %436 = vmax.xlane.f32.xlu0 %v358
    %v437 = vpop.xlane.xlu0 %436
    %438 = vmax.xlane.f32.xlu0 %v361
    %v439 = vpop.xlane.xlu0 %438
    %440 = vmax.xlane.f32.xlu0 %v364
    %v441 = vpop.xlane.xlu0 %440
    %442 = vmax.xlane.f32.xlu0 %v367
    %v443 = vpop.xlane.xlu0 %442
    %444 = vmax.xlane.f32.xlu0 %v370
    %v445 = vpop.xlane.xlu0 %444
    %446 = vmax.xlane.f32.xlu0 %v373
    %v447 = vpop.xlane.xlu0 %446
    %448 = vmax.xlane.f32.xlu0 %v376
    %v449 = vpop.xlane.xlu0 %448
    %450 = vmax.xlane.f32.xlu0 %v379
    %v451 = vpop.xlane.xlu0 %450
    %452 = vmax.xlane.f32.xlu0 %v382
    %v453 = vpop.xlane.xlu0 %452
    %454 = vmax.xlane.f32.xlu0 %v385
    %v455 = vpop.xlane.xlu0 %454
    %456 = vmax.xlane.f32.xlu0 %v388
    %v457 = vpop.xlane.xlu0 %456
    %458 = vmax.xlane.f32.xlu0 %v391
    %v459 = vpop.xlane.xlu0 %458
    %460 = vmax.xlane.f32.xlu0 %v394
    %v461 = vpop.xlane.xlu0 %460
    %462 = vmax.xlane.f32.xlu0 %v397
    %v463 = vpop.xlane.xlu0 %462
    %464 = vmax.xlane.f32.xlu0 %v400
    %v465 = vpop.xlane.xlu0 %464
    %v466 = vsub.f32 %v194, %v403
    %v467 = vsub.f32 %v197, %v405
    %v468 = vsub.f32 %v200, %v407
    %v469 = vsub.f32 %v203, %v409
    %v470 = vsub.f32 %v206, %v411
    %v471 = vsub.f32 %v209, %v413
    %v472 = vsub.f32 %v212, %v415
    %v473 = vsub.f32 %v215, %v417
    %v474 = vsub.f32 %v218, %v419
    %v475 = vsub.f32 %v221, %v421
    %v476 = vsub.f32 %v224, %v423
    %v477 = vsub.f32 %v227, %v425
    %v478 = vsub.f32 %v230, %v427
    %v479 = vsub.f32 %v233, %v429
    %v480 = vsub.f32 %v236, %v431
    %v481 = vsub.f32 %v239, %v433
    %v482 = vsub.f32 %v355, %v435
    %v483 = vsub.f32 %v358, %v437
    %v484 = vsub.f32 %v361, %v439
    %v485 = vsub.f32 %v364, %v441
    %v486 = vsub.f32 %v367, %v443
    %v487 = vsub.f32 %v370, %v445
    %v488 = vsub.f32 %v373, %v447
    %v489 = vsub.f32 %v376, %v449
    %v490 = vsub.f32 %v379, %v451
    %v491 = vsub.f32 %v382, %v453
    %v492 = vsub.f32 %v385, %v455
    %v493 = vsub.f32 %v388, %v457
    %v494 = vsub.f32 %v391, %v459
    %v495 = vsub.f32 %v394, %v461
    %v496 = vsub.f32 %v397, %v463
    %v497 = vsub.f32 %v400, %v465
    %v498 = vmul.f32 %v466, 1.442695
    %v499 = vpow.pop %v498
    %v500 = vmul.f32 %v467, 1.442695
    %v501 = vpow.pop %v500
    %v502 = vmul.f32 %v468, 1.442695
    %v503 = vpow.pop %v502
    %v504 = vmul.f32 %v469, 1.442695
    %v505 = vpow.pop %v504
    %v506 = vmul.f32 %v470, 1.442695
    %v507 = vpow.pop %v506
    %v508 = vmul.f32 %v471, 1.442695
    %v509 = vpow.pop %v508
    %v510 = vmul.f32 %v472, 1.442695
    %v511 = vpow.pop %v510
    %v512 = vmul.f32 %v473, 1.442695
    %v513 = vpow.pop %v512
    %v514 = vmul.f32 %v474, 1.442695
    %v515 = vpow.pop %v514
    %v516 = vmul.f32 %v475, 1.442695
    %v517 = vpow.pop %v516
    %v518 = vmul.f32 %v476, 1.442695
    %v519 = vpow.pop %v518
    %v520 = vmul.f32 %v477, 1.442695
    %v521 = vpow.pop %v520
    %v522 = vmul.f32 %v478, 1.442695
    %v523 = vpow.pop %v522
    %v524 = vmul.f32 %v479, 1.442695
    %v525 = vpow.pop %v524
    %v526 = vmul.f32 %v480, 1.442695
    %v527 = vpow.pop %v526
    %v528 = vmul.f32 %v481, 1.442695
    %v529 = vpow.pop %v528
    %v530 = vmul.f32 %v482, 1.442695
    %v531 = vpow.pop %v530
    %v532 = vmul.f32 %v483, 1.442695
    %v533 = vpow.pop %v532
    %v534 = vmul.f32 %v484, 1.442695
    %v535 = vpow.pop %v534
    %v536 = vmul.f32 %v485, 1.442695
    %v537 = vpow.pop %v536
    %v538 = vmul.f32 %v486, 1.442695
    %v539 = vpow.pop %v538
    %v540 = vmul.f32 %v487, 1.442695
    %v541 = vpow.pop %v540
    %v542 = vmul.f32 %v488, 1.442695
    %v543 = vpow.pop %v542
    %v544 = vmul.f32 %v489, 1.442695
    %v545 = vpow.pop %v544
    %v546 = vmul.f32 %v490, 1.442695
    %v547 = vpow.pop %v546
    %v548 = vmul.f32 %v491, 1.442695
    %v549 = vpow.pop %v548
    %v550 = vmul.f32 %v492, 1.442695
    %v551 = vpow.pop %v550
    %v552 = vmul.f32 %v493, 1.442695
    %v553 = vpow.pop %v552
    %v554 = vmul.f32 %v494, 1.442695
    %v555 = vpow.pop %v554
    %v556 = vmul.f32 %v495, 1.442695
    %v557 = vpow.pop %v556
    %v558 = vmul.f32 %v496, 1.442695
    %v559 = vpow.pop %v558
    %v560 = vmul.f32 %v497, 1.442695
    %v561 = vpow.pop %v560
    %562 = vadd.xlane.f32.xlu0 %v499
    %v563 = vpop.xlane.xlu0 %562
    %564 = vadd.xlane.f32.xlu0 %v501
    %v565 = vpop.xlane.xlu0 %564
    %566 = vadd.xlane.f32.xlu0 %v503
    %v567 = vpop.xlane.xlu0 %566
    %568 = vadd.xlane.f32.xlu0 %v505
    %v569 = vpop.xlane.xlu0 %568
    %570 = vadd.xlane.f32.xlu0 %v507
    %v571 = vpop.xlane.xlu0 %570
    %572 = vadd.xlane.f32.xlu0 %v509
    %v573 = vpop.xlane.xlu0 %572
    %574 = vadd.xlane.f32.xlu0 %v511
    %v575 = vpop.xlane.xlu0 %574
    %576 = vadd.xlane.f32.xlu0 %v513
    %v577 = vpop.xlane.xlu0 %576
    %578 = vadd.xlane.f32.xlu0 %v515
    %v579 = vpop.xlane.xlu0 %578
    %580 = vadd.xlane.f32.xlu0 %v517
    %v581 = vpop.xlane.xlu0 %580
    %582 = vadd.xlane.f32.xlu0 %v519
    %v583 = vpop.xlane.xlu0 %582
    %584 = vadd.xlane.f32.xlu0 %v521
    %v585 = vpop.xlane.xlu0 %584
    %586 = vadd.xlane.f32.xlu0 %v523
    %v587 = vpop.xlane.xlu0 %586
    %588 = vadd.xlane.f32.xlu0 %v525
    %v589 = vpop.xlane.xlu0 %588
    %590 = vadd.xlane.f32.xlu0 %v527
    %v591 = vpop.xlane.xlu0 %590
    %592 = vadd.xlane.f32.xlu0 %v529
    %v593 = vpop.xlane.xlu0 %592
    %594 = vadd.xlane.f32.xlu0 %v531
    %v595 = vpop.xlane.xlu0 %594
    %596 = vadd.xlane.f32.xlu0 %v533
    %v597 = vpop.xlane.xlu0 %596
    %598 = vadd.xlane.f32.xlu0 %v535
    %v599 = vpop.xlane.xlu0 %598
    %600 = vadd.xlane.f32.xlu0 %v537
    %v601 = vpop.xlane.xlu0 %600
    %602 = vadd.xlane.f32.xlu0 %v539
    %v603 = vpop.xlane.xlu0 %602
    %604 = vadd.xlane.f32.xlu0 %v541
    %v605 = vpop.xlane.xlu0 %604
    %606 = vadd.xlane.f32.xlu0 %v543
    %v607 = vpop.xlane.xlu0 %606
    %608 = vadd.xlane.f32.xlu0 %v545
    %v609 = vpop.xlane.xlu0 %608
    %610 = vadd.xlane.f32.xlu0 %v547
    %v611 = vpop.xlane.xlu0 %610
    %612 = vadd.xlane.f32.xlu0 %v549
    %v613 = vpop.xlane.xlu0 %612
    %614 = vadd.xlane.f32.xlu0 %v551
    %v615 = vpop.xlane.xlu0 %614
    %616 = vadd.xlane.f32.xlu0 %v553
    %v617 = vpop.xlane.xlu0 %616
    %618 = vadd.xlane.f32.xlu0 %v555
    %v619 = vpop.xlane.xlu0 %618
    %620 = vadd.xlane.f32.xlu0 %v557
    %v621 = vpop.xlane.xlu0 %620
    %622 = vadd.xlane.f32.xlu0 %v559
    %v623 = vpop.xlane.xlu0 %622
    %624 = vadd.xlane.f32.xlu0 %v561
    %v625 = vpop.xlane.xlu0 %624
    %v626 = vrcp.pop %v563
    %v627 = vmul.f32 %v563, %v626
    %v628 = vsub.f32 1.0, %v627
    %v629 = vmul.f32 %v626, %v628
    %v630 = vadd.f32 %v626, %v629
    %vm631 = vweird.f32 %v563
    %vm632 = vweird.f32 %v626
    %vm633 = vmor %vm631, %vm632
    %v634 = vsel %vm633, %v626, %v630
    %v635 = vand.u32 2147483647, %v563
    %vm636 = vcmp.eq.f32.partialorder %v635, 8.507059e+37
    %v637 = vand.u32 %v563, 2147483648
    %v638 = vor.u32 1.1754944e-38, %v637
    %v639 = vsel %vm636, %v638, %v634
    %v640 = vmul.f32 3.3333333, %v639
    %v641 = vrcp.pop %v565
    %v642 = vmul.f32 %v565, %v641
    %v643 = vsub.f32 1.0, %v642
    %v644 = vmul.f32 %v641, %v643
    %v645 = vadd.f32 %v641, %v644
    %vm646 = vweird.f32 %v565
    %vm647 = vweird.f32 %v641
    %vm648 = vmor %vm646, %vm647
    %v649 = vsel %vm648, %v641, %v645
    %v650 = vand.u32 2147483647, %v565
    %vm651 = vcmp.eq.f32.partialorder %v650, 8.507059e+37
    %v652 = vand.u32 %v565, 2147483648
    %v653 = vor.u32 1.1754944e-38, %v652
    %v654 = vsel %vm651, %v653, %v649
    %v655 = vmul.f32 3.3333333, %v654
    %v656 = vrcp.pop %v567
    %v657 = vmul.f32 %v567, %v656
    %v658 = vsub.f32 1.0, %v657
    %v659 = vmul.f32 %v656, %v658
    %v660 = vadd.f32 %v656, %v659
    %vm661 = vweird.f32 %v567
    %vm662 = vweird.f32 %v656
    %vm663 = vmor %vm661, %vm662
    %v664 = vsel %vm663, %v656, %v660
    %v665 = vand.u32 2147483647, %v567
    %vm666 = vcmp.eq.f32.partialorder %v665, 8.507059e+37
    %v667 = vand.u32 %v567, 2147483648
    %v668 = vor.u32 1.1754944e-38, %v667
    %v669 = vsel %vm666, %v668, %v664
    %v670 = vmul.f32 3.3333333, %v669
    %v671 = vrcp.pop %v569
    %v672 = vmul.f32 %v569, %v671
    %v673 = vsub.f32 1.0, %v672
    %v674 = vmul.f32 %v671, %v673
    %v675 = vadd.f32 %v671, %v674
    %vm676 = vweird.f32 %v569
    %vm677 = vweird.f32 %v671
    %vm678 = vmor %vm676, %vm677
    %v679 = vsel %vm678, %v671, %v675
    %v680 = vand.u32 2147483647, %v569
    %vm681 = vcmp.eq.f32.partialorder %v680, 8.507059e+37
    %v682 = vand.u32 %v569, 2147483648
    %v683 = vor.u32 1.1754944e-38, %v682
    %v684 = vsel %vm681, %v683, %v679
    %v685 = vmul.f32 3.3333333, %v684
    %v686 = vrcp.pop %v571
    %v687 = vmul.f32 %v571, %v686
    %v688 = vsub.f32 1.0, %v687
    %v689 = vmul.f32 %v686, %v688
    %v690 = vadd.f32 %v686, %v689
    %vm691 = vweird.f32 %v571
    %vm692 = vweird.f32 %v686
    %vm693 = vmor %vm691, %vm692
    %v694 = vsel %vm693, %v686, %v690
    %v695 = vand.u32 2147483647, %v571
    %vm696 = vcmp.eq.f32.partialorder %v695, 8.507059e+37
    %v697 = vand.u32 %v571, 2147483648
    %v698 = vor.u32 1.1754944e-38, %v697
    %v699 = vsel %vm696, %v698, %v694
    %v700 = vmul.f32 3.3333333, %v699
    %v701 = vrcp.pop %v573
    %v702 = vmul.f32 %v573, %v701
    %v703 = vsub.f32 1.0, %v702
    %v704 = vmul.f32 %v701, %v703
    %v705 = vadd.f32 %v701, %v704
    %vm706 = vweird.f32 %v573
    %vm707 = vweird.f32 %v701
    %vm708 = vmor %vm706, %vm707
    %v709 = vsel %vm708, %v701, %v705
    %v710 = vand.u32 2147483647, %v573
    %vm711 = vcmp.eq.f32.partialorder %v710, 8.507059e+37
    %v712 = vand.u32 %v573, 2147483648
    %v713 = vor.u32 1.1754944e-38, %v712
    %v714 = vsel %vm711, %v713, %v709
    %v715 = vmul.f32 3.3333333, %v714
    %v716 = vrcp.pop %v575
    %v717 = vmul.f32 %v575, %v716
    %v718 = vsub.f32 1.0, %v717
    %v719 = vmul.f32 %v716, %v718
    %v720 = vadd.f32 %v716, %v719
    %vm721 = vweird.f32 %v575
    %vm722 = vweird.f32 %v716
    %vm723 = vmor %vm721, %vm722
    %v724 = vsel %vm723, %v716, %v720
    %v725 = vand.u32 2147483647, %v575
    %vm726 = vcmp.eq.f32.partialorder %v725, 8.507059e+37
    %v727 = vand.u32 %v575, 2147483648
    %v728 = vor.u32 1.1754944e-38, %v727
    %v729 = vsel %vm726, %v728, %v724
    %v730 = vmul.f32 3.3333333, %v729
    %v731 = vrcp.pop %v577
    %v732 = vmul.f32 %v577, %v731
    %v733 = vsub.f32 1.0, %v732
    %v734 = vmul.f32 %v731, %v733
    %v735 = vadd.f32 %v731, %v734
    %vm736 = vweird.f32 %v577
    %vm737 = vweird.f32 %v731
    %vm738 = vmor %vm736, %vm737
    %v739 = vsel %vm738, %v731, %v735
    %v740 = vand.u32 2147483647, %v577
    %vm741 = vcmp.eq.f32.partialorder %v740, 8.507059e+37
    %v742 = vand.u32 %v577, 2147483648
    %v743 = vor.u32 1.1754944e-38, %v742
    %v744 = vsel %vm741, %v743, %v739
    %v745 = vmul.f32 3.3333333, %v744
    %v746 = vrcp.pop %v579
    %v747 = vmul.f32 %v579, %v746
    %v748 = vsub.f32 1.0, %v747
    %v749 = vmul.f32 %v746, %v748
    %v750 = vadd.f32 %v746, %v749
    %vm751 = vweird.f32 %v579
    %vm752 = vweird.f32 %v746
    %vm753 = vmor %vm751, %vm752
    %v754 = vsel %vm753, %v746, %v750
    %v755 = vand.u32 2147483647, %v579
    %vm756 = vcmp.eq.f32.partialorder %v755, 8.507059e+37
    %v757 = vand.u32 %v579, 2147483648
    %v758 = vor.u32 1.1754944e-38, %v757
    %v759 = vsel %vm756, %v758, %v754
    %v760 = vmul.f32 3.3333333, %v759
    %v761 = vrcp.pop %v581
    %v762 = vmul.f32 %v581, %v761
    %v763 = vsub.f32 1.0, %v762
    %v764 = vmul.f32 %v761, %v763
    %v765 = vadd.f32 %v761, %v764
    %vm766 = vweird.f32 %v581
    %vm767 = vweird.f32 %v761
    %vm768 = vmor %vm766, %vm767
    %v769 = vsel %vm768, %v761, %v765
    %v770 = vand.u32 2147483647, %v581
    %vm771 = vcmp.eq.f32.partialorder %v770, 8.507059e+37
    %v772 = vand.u32 %v581, 2147483648
    %v773 = vor.u32 1.1754944e-38, %v772
    %v774 = vsel %vm771, %v773, %v769
    %v775 = vmul.f32 3.3333333, %v774
    %v776 = vrcp.pop %v583
    %v777 = vmul.f32 %v583, %v776
    %v778 = vsub.f32 1.0, %v777
    %v779 = vmul.f32 %v776, %v778
    %v780 = vadd.f32 %v776, %v779
    %vm781 = vweird.f32 %v583
    %vm782 = vweird.f32 %v776
    %vm783 = vmor %vm781, %vm782
    %v784 = vsel %vm783, %v776, %v780
    %v785 = vand.u32 2147483647, %v583
    %vm786 = vcmp.eq.f32.partialorder %v785, 8.507059e+37
    %v787 = vand.u32 %v583, 2147483648
    %v788 = vor.u32 1.1754944e-38, %v787
    %v789 = vsel %vm786, %v788, %v784
    %v790 = vmul.f32 3.3333333, %v789
    %v791 = vrcp.pop %v585
    %v792 = vmul.f32 %v585, %v791
    %v793 = vsub.f32 1.0, %v792
    %v794 = vmul.f32 %v791, %v793
    %v795 = vadd.f32 %v791, %v794
    %vm796 = vweird.f32 %v585
    %vm797 = vweird.f32 %v791
    %vm798 = vmor %vm796, %vm797
    %v799 = vsel %vm798, %v791, %v795
    %v800 = vand.u32 2147483647, %v585
    %vm801 = vcmp.eq.f32.partialorder %v800, 8.507059e+37
    %v802 = vand.u32 %v585, 2147483648
    %v803 = vor.u32 1.1754944e-38, %v802
    %v804 = vsel %vm801, %v803, %v799
    %v805 = vmul.f32 3.3333333, %v804
    %v806 = vrcp.pop %v587
    %v807 = vmul.f32 %v587, %v806
    %v808 = vsub.f32 1.0, %v807
    %v809 = vmul.f32 %v806, %v808
    %v810 = vadd.f32 %v806, %v809
    %vm811 = vweird.f32 %v587
    %vm812 = vweird.f32 %v806
    %vm813 = vmor %vm811, %vm812
    %v814 = vsel %vm813, %v806, %v810
    %v815 = vand.u32 2147483647, %v587
    %vm816 = vcmp.eq.f32.partialorder %v815, 8.507059e+37
    %v817 = vand.u32 %v587, 2147483648
    %v818 = vor.u32 1.1754944e-38, %v817
    %v819 = vsel %vm816, %v818, %v814
    %v820 = vmul.f32 3.3333333, %v819
    %v821 = vrcp.pop %v589
    %v822 = vmul.f32 %v589, %v821
    %v823 = vsub.f32 1.0, %v822
    %v824 = vmul.f32 %v821, %v823
    %v825 = vadd.f32 %v821, %v824
    %vm826 = vweird.f32 %v589
    %vm827 = vweird.f32 %v821
    %vm828 = vmor %vm826, %vm827
    %v829 = vsel %vm828, %v821, %v825
    %v830 = vand.u32 2147483647, %v589
    %vm831 = vcmp.eq.f32.partialorder %v830, 8.507059e+37
    %v832 = vand.u32 %v589, 2147483648
    %v833 = vor.u32 1.1754944e-38, %v832
    %v834 = vsel %vm831, %v833, %v829
    %v835 = vmul.f32 3.3333333, %v834
    %v836 = vrcp.pop %v591
    %v837 = vmul.f32 %v591, %v836
    %v838 = vsub.f32 1.0, %v837
    %v839 = vmul.f32 %v836, %v838
    %v840 = vadd.f32 %v836, %v839
    %vm841 = vweird.f32 %v591
    %vm842 = vweird.f32 %v836
    %vm843 = vmor %vm841, %vm842
    %v844 = vsel %vm843, %v836, %v840
    %v845 = vand.u32 2147483647, %v591
    %vm846 = vcmp.eq.f32.partialorder %v845, 8.507059e+37
    %v847 = vand.u32 %v591, 2147483648
    %v848 = vor.u32 1.1754944e-38, %v847
    %v849 = vsel %vm846, %v848, %v844
    %v850 = vmul.f32 3.3333333, %v849
    %v851 = vrcp.pop %v593
    %v852 = vmul.f32 %v593, %v851
    %v853 = vsub.f32 1.0, %v852
    %v854 = vmul.f32 %v851, %v853
    %v855 = vadd.f32 %v851, %v854
    %vm856 = vweird.f32 %v593
    %vm857 = vweird.f32 %v851
    %vm858 = vmor %vm856, %vm857
    %v859 = vsel %vm858, %v851, %v855
    %v860 = vand.u32 2147483647, %v593
    %vm861 = vcmp.eq.f32.partialorder %v860, 8.507059e+37
    %v862 = vand.u32 %v593, 2147483648
    %v863 = vor.u32 1.1754944e-38, %v862
    %v864 = vsel %vm861, %v863, %v859
    %v865 = vmul.f32 3.3333333, %v864
    %v866 = vrcp.pop %v595
    %v867 = vmul.f32 %v595, %v866
    %v868 = vsub.f32 1.0, %v867
    %v869 = vmul.f32 %v866, %v868
    %v870 = vadd.f32 %v866, %v869
    %vm871 = vweird.f32 %v595
    %vm872 = vweird.f32 %v866
    %vm873 = vmor %vm871, %vm872
    %v874 = vsel %vm873, %v866, %v870
    %v875 = vand.u32 2147483647, %v595
    %vm876 = vcmp.eq.f32.partialorder %v875, 8.507059e+37
    %v877 = vand.u32 %v595, 2147483648
    %v878 = vor.u32 1.1754944e-38, %v877
    %v879 = vsel %vm876, %v878, %v874
    %v880 = vmul.f32 3.3333333, %v879
    %v881 = vrcp.pop %v597
    %v882 = vmul.f32 %v597, %v881
    %v883 = vsub.f32 1.0, %v882
    %v884 = vmul.f32 %v881, %v883
    %v885 = vadd.f32 %v881, %v884
    %vm886 = vweird.f32 %v597
    %vm887 = vweird.f32 %v881
    %vm888 = vmor %vm886, %vm887
    %v889 = vsel %vm888, %v881, %v885
    %v890 = vand.u32 2147483647, %v597
    %vm891 = vcmp.eq.f32.partialorder %v890, 8.507059e+37
    %v892 = vand.u32 %v597, 2147483648
    %v893 = vor.u32 1.1754944e-38, %v892
    %v894 = vsel %vm891, %v893, %v889
    %v895 = vmul.f32 3.3333333, %v894
    %v896 = vrcp.pop %v599
    %v897 = vmul.f32 %v599, %v896
    %v898 = vsub.f32 1.0, %v897
    %v899 = vmul.f32 %v896, %v898
    %v900 = vadd.f32 %v896, %v899
    %vm901 = vweird.f32 %v599
    %vm902 = vweird.f32 %v896
    %vm903 = vmor %vm901, %vm902
    %v904 = vsel %vm903, %v896, %v900
    %v905 = vand.u32 2147483647, %v599
    %vm906 = vcmp.eq.f32.partialorder %v905, 8.507059e+37
    %v907 = vand.u32 %v599, 2147483648
    %v908 = vor.u32 1.1754944e-38, %v907
    %v909 = vsel %vm906, %v908, %v904
    %v910 = vmul.f32 3.3333333, %v909
    %v911 = vrcp.pop %v601
    %v912 = vmul.f32 %v601, %v911
    %v913 = vsub.f32 1.0, %v912
    %v914 = vmul.f32 %v911, %v913
    %v915 = vadd.f32 %v911, %v914
    %vm916 = vweird.f32 %v601
    %vm917 = vweird.f32 %v911
    %vm918 = vmor %vm916, %vm917
    %v919 = vsel %vm918, %v911, %v915
    %v920 = vand.u32 2147483647, %v601
    %vm921 = vcmp.eq.f32.partialorder %v920, 8.507059e+37
    %v922 = vand.u32 %v601, 2147483648
    %v923 = vor.u32 1.1754944e-38, %v922
    %v924 = vsel %vm921, %v923, %v919
    %v925 = vmul.f32 3.3333333, %v924
    %v926 = vrcp.pop %v603
    %v927 = vmul.f32 %v603, %v926
    %v928 = vsub.f32 1.0, %v927
    %v929 = vmul.f32 %v926, %v928
    %v930 = vadd.f32 %v926, %v929
    %vm931 = vweird.f32 %v603
    %vm932 = vweird.f32 %v926
    %vm933 = vmor %vm931, %vm932
    %v934 = vsel %vm933, %v926, %v930
    %v935 = vand.u32 2147483647, %v603
    %vm936 = vcmp.eq.f32.partialorder %v935, 8.507059e+37
    %v937 = vand.u32 %v603, 2147483648
    %v938 = vor.u32 1.1754944e-38, %v937
    %v939 = vsel %vm936, %v938, %v934
    %v940 = vmul.f32 3.3333333, %v939
    %v941 = vrcp.pop %v605
    %v942 = vmul.f32 %v605, %v941
    %v943 = vsub.f32 1.0, %v942
    %v944 = vmul.f32 %v941, %v943
    %v945 = vadd.f32 %v941, %v944
    %vm946 = vweird.f32 %v605
    %vm947 = vweird.f32 %v941
    %vm948 = vmor %vm946, %vm947
    %v949 = vsel %vm948, %v941, %v945
    %v950 = vand.u32 2147483647, %v605
    %vm951 = vcmp.eq.f32.partialorder %v950, 8.507059e+37
    %v952 = vand.u32 %v605, 2147483648
    %v953 = vor.u32 1.1754944e-38, %v952
    %v954 = vsel %vm951, %v953, %v949
    %v955 = vmul.f32 3.3333333, %v954
    %v956 = vrcp.pop %v607
    %v957 = vmul.f32 %v607, %v956
    %v958 = vsub.f32 1.0, %v957
    %v959 = vmul.f32 %v956, %v958
    %v960 = vadd.f32 %v956, %v959
    %vm961 = vweird.f32 %v607
    %vm962 = vweird.f32 %v956
    %vm963 = vmor %vm961, %vm962
    %v964 = vsel %vm963, %v956, %v960
    %v965 = vand.u32 2147483647, %v607
    %vm966 = vcmp.eq.f32.partialorder %v965, 8.507059e+37
    %v967 = vand.u32 %v607, 2147483648
    %v968 = vor.u32 1.1754944e-38, %v967
    %v969 = vsel %vm966, %v968, %v964
    %v970 = vmul.f32 3.3333333, %v969
    %v971 = vrcp.pop %v609
    %v972 = vmul.f32 %v609, %v971
    %v973 = vsub.f32 1.0, %v972
    %v974 = vmul.f32 %v971, %v973
    %v975 = vadd.f32 %v971, %v974
    %vm976 = vweird.f32 %v609
    %vm977 = vweird.f32 %v971
    %vm978 = vmor %vm976, %vm977
    %v979 = vsel %vm978, %v971, %v975
    %v980 = vand.u32 2147483647, %v609
    %vm981 = vcmp.eq.f32.partialorder %v980, 8.507059e+37
    %v982 = vand.u32 %v609, 2147483648
    %v983 = vor.u32 1.1754944e-38, %v982
    %v984 = vsel %vm981, %v983, %v979
    %v985 = vmul.f32 3.3333333, %v984
    %v986 = vrcp.pop %v611
    %v987 = vmul.f32 %v611, %v986
    %v988 = vsub.f32 1.0, %v987
    %v989 = vmul.f32 %v986, %v988
    %v990 = vadd.f32 %v986, %v989
    %vm991 = vweird.f32 %v611
    %vm992 = vweird.f32 %v986
    %vm993 = vmor %vm991, %vm992
    %v994 = vsel %vm993, %v986, %v990
    %v995 = vand.u32 2147483647, %v611
    %vm996 = vcmp.eq.f32.partialorder %v995, 8.507059e+37
    %v997 = vand.u32 %v611, 2147483648
    %v998 = vor.u32 1.1754944e-38, %v997
    %v999 = vsel %vm996, %v998, %v994
    %v1000 = vmul.f32 3.3333333, %v999
    %v1001 = vrcp.pop %v613
    %v1002 = vmul.f32 %v613, %v1001
    %v1003 = vsub.f32 1.0, %v1002
    %v1004 = vmul.f32 %v1001, %v1003
    %v1005 = vadd.f32 %v1001, %v1004
    %vm1006 = vweird.f32 %v613
    %vm1007 = vweird.f32 %v1001
    %vm1008 = vmor %vm1006, %vm1007
    %v1009 = vsel %vm1008, %v1001, %v1005
    %v1010 = vand.u32 2147483647, %v613
    %vm1011 = vcmp.eq.f32.partialorder %v1010, 8.507059e+37
    %v1012 = vand.u32 %v613, 2147483648
    %v1013 = vor.u32 1.1754944e-38, %v1012
    %v1014 = vsel %vm1011, %v1013, %v1009
    %v1015 = vmul.f32 3.3333333, %v1014
    %v1016 = vrcp.pop %v615
    %v1017 = vmul.f32 %v615, %v1016
    %v1018 = vsub.f32 1.0, %v1017
    %v1019 = vmul.f32 %v1016, %v1018
    %v1020 = vadd.f32 %v1016, %v1019
    %vm1021 = vweird.f32 %v615
    %vm1022 = vweird.f32 %v1016
    %vm1023 = vmor %vm1021, %vm1022
    %v1024 = vsel %vm1023, %v1016, %v1020
    %v1025 = vand.u32 2147483647, %v615
    %vm1026 = vcmp.eq.f32.partialorder %v1025, 8.507059e+37
    %v1027 = vand.u32 %v615, 2147483648
    %v1028 = vor.u32 1.1754944e-38, %v1027
    %v1029 = vsel %vm1026, %v1028, %v1024
    %v1030 = vmul.f32 3.3333333, %v1029
    %v1031 = vrcp.pop %v617
    %v1032 = vmul.f32 %v617, %v1031
    %v1033 = vsub.f32 1.0, %v1032
    %v1034 = vmul.f32 %v1031, %v1033
    %v1035 = vadd.f32 %v1031, %v1034
    %vm1036 = vweird.f32 %v617
    %vm1037 = vweird.f32 %v1031
    %vm1038 = vmor %vm1036, %vm1037
    %v1039 = vsel %vm1038, %v1031, %v1035
    %v1040 = vand.u32 2147483647, %v617
    %vm1041 = vcmp.eq.f32.partialorder %v1040, 8.507059e+37
    %v1042 = vand.u32 %v617, 2147483648
    %v1043 = vor.u32 1.1754944e-38, %v1042
    %v1044 = vsel %vm1041, %v1043, %v1039
    %v1045 = vmul.f32 3.3333333, %v1044
    %v1046 = vrcp.pop %v619
    %v1047 = vmul.f32 %v619, %v1046
    %v1048 = vsub.f32 1.0, %v1047
    %v1049 = vmul.f32 %v1046, %v1048
    %v1050 = vadd.f32 %v1046, %v1049
    %vm1051 = vweird.f32 %v619
    %vm1052 = vweird.f32 %v1046
    %vm1053 = vmor %vm1051, %vm1052
    %v1054 = vsel %vm1053, %v1046, %v1050
    %v1055 = vand.u32 2147483647, %v619
    %vm1056 = vcmp.eq.f32.partialorder %v1055, 8.507059e+37
    %v1057 = vand.u32 %v619, 2147483648
    %v1058 = vor.u32 1.1754944e-38, %v1057
    %v1059 = vsel %vm1056, %v1058, %v1054
    %v1060 = vmul.f32 3.3333333, %v1059
    %v1061 = vrcp.pop %v621
    %v1062 = vmul.f32 %v621, %v1061
    %v1063 = vsub.f32 1.0, %v1062
    %v1064 = vmul.f32 %v1061, %v1063
    %v1065 = vadd.f32 %v1061, %v1064
    %vm1066 = vweird.f32 %v621
    %vm1067 = vweird.f32 %v1061
    %vm1068 = vmor %vm1066, %vm1067
    %v1069 = vsel %vm1068, %v1061, %v1065
    %v1070 = vand.u32 2147483647, %v621
    %vm1071 = vcmp.eq.f32.partialorder %v1070, 8.507059e+37
    %v1072 = vand.u32 %v621, 2147483648
    %v1073 = vor.u32 1.1754944e-38, %v1072
    %v1074 = vsel %vm1071, %v1073, %v1069
    %v1075 = vmul.f32 3.3333333, %v1074
    %v1076 = vrcp.pop %v623
    %v1077 = vmul.f32 %v623, %v1076
    %v1078 = vsub.f32 1.0, %v1077
    %v1079 = vmul.f32 %v1076, %v1078
    %v1080 = vadd.f32 %v1076, %v1079
    %vm1081 = vweird.f32 %v623
    %vm1082 = vweird.f32 %v1076
    %vm1083 = vmor %vm1081, %vm1082
    %v1084 = vsel %vm1083, %v1076, %v1080
    %v1085 = vand.u32 2147483647, %v623
    %vm1086 = vcmp.eq.f32.partialorder %v1085, 8.507059e+37
    %v1087 = vand.u32 %v623, 2147483648
    %v1088 = vor.u32 1.1754944e-38, %v1087
    %v1089 = vsel %vm1086, %v1088, %v1084
    %v1090 = vmul.f32 3.3333333, %v1089
    %v1091 = vrcp.pop %v625
    %v1092 = vmul.f32 %v625, %v1091
    %v1093 = vsub.f32 1.0, %v1092
    %v1094 = vmul.f32 %v1091, %v1093
    %v1095 = vadd.f32 %v1091, %v1094
    %vm1096 = vweird.f32 %v625
    %vm1097 = vweird.f32 %v1091
    %vm1098 = vmor %vm1096, %vm1097
    %v1099 = vsel %vm1098, %v1091, %v1095
    %v1100 = vand.u32 2147483647, %v625
    %vm1101 = vcmp.eq.f32.partialorder %v1100, 8.507059e+37
    %v1102 = vand.u32 %v625, 2147483648
    %v1103 = vor.u32 1.1754944e-38, %v1102
    %v1104 = vsel %vm1101, %v1103, %v1099
    %v1105 = vmul.f32 3.3333333, %v1104
    %v1106 = vld [vmem:[%s0] sm:$0xff]
    %v1107 = vld [vmem:[%s0 + $0x8] sm:$0xff]
    %v1108 = vld [vmem:[%s0 + $0x10] sm:$0xff]
    %v1109 = vld [vmem:[%s0 + $0x18] sm:$0xff]
    %v1110 = vld [vmem:[%s0 + $0x20] sm:$0xff]
    %v1111 = vld [vmem:[%s0 + $0x28] sm:$0xff]
    %v1112 = vld [vmem:[%s0 + $0x30] sm:$0xff]
    %v1113 = vld [vmem:[%s0 + $0x38] sm:$0xff]
    %v1114 = vld [vmem:[%s0 + $0x40] sm:$0xff]
    %v1115 = vld [vmem:[%s0 + $0x48] sm:$0xff]
    %v1116 = vld [vmem:[%s0 + $0x50] sm:$0xff]
    %v1117 = vld [vmem:[%s0 + $0x58] sm:$0xff]
    %v1118 = vld [vmem:[%s0 + $0x60] sm:$0xff]
    %v1119 = vld [vmem:[%s0 + $0x68] sm:$0xff]
    %v1120 = vld [vmem:[%s0 + $0x70] sm:$0xff]
    %v1121 = vld [vmem:[%s0 + $0x78] sm:$0xff]
    %v1122 = vld [vmem:[%s0 + $0x80] sm:$0xff]
    %v1123 = vld [vmem:[%s0 + $0x88] sm:$0xff]
    %v1124 = vld [vmem:[%s0 + $0x90] sm:$0xff]
    %v1125 = vld [vmem:[%s0 + $0x98] sm:$0xff]
    %v1126 = vld [vmem:[%s0 + $0xa0] sm:$0xff]
    %v1127 = vld [vmem:[%s0 + $0xa8] sm:$0xff]
    %v1128 = vld [vmem:[%s0 + $0xb0] sm:$0xff]
    %v1129 = vld [vmem:[%s0 + $0xb8] sm:$0xff]
    %v1130 = vld [vmem:[%s0 + $0xc0] sm:$0xff]
    %v1131 = vld [vmem:[%s0 + $0xc8] sm:$0xff]
    %v1132 = vld [vmem:[%s0 + $0xd0] sm:$0xff]
    %v1133 = vld [vmem:[%s0 + $0xd8] sm:$0xff]
    %v1134 = vld [vmem:[%s0 + $0xe0] sm:$0xff]
    %v1135 = vld [vmem:[%s0 + $0xe8] sm:$0xff]
    %v1136 = vld [vmem:[%s0 + $0xf0] sm:$0xff]
    %v1137 = vld [vmem:[%s0 + $0xf8] sm:$0xff]
    %v1138 = vadd.s32 %v1106, 2147483648
    %vm1140 = vcmp.ge.s32.totalorder %v1138, 858993459
    %v1141 = vadd.s32 %v1107, 2147483648
    %vm1143 = vcmp.ge.s32.totalorder %v1141, 858993459
    %v1144 = vadd.s32 %v1108, 2147483648
    %vm1146 = vcmp.ge.s32.totalorder %v1144, 858993459
    %v1147 = vadd.s32 %v1109, 2147483648
    %vm1149 = vcmp.ge.s32.totalorder %v1147, 858993459
    %v1150 = vadd.s32 %v1110, 2147483648
    %vm1152 = vcmp.ge.s32.totalorder %v1150, 858993459
    %v1153 = vadd.s32 %v1111, 2147483648
    %vm1155 = vcmp.ge.s32.totalorder %v1153, 858993459
    %v1156 = vadd.s32 %v1112, 2147483648
    %vm1158 = vcmp.ge.s32.totalorder %v1156, 858993459
    %v1159 = vadd.s32 %v1113, 2147483648
    %vm1161 = vcmp.ge.s32.totalorder %v1159, 858993459
    %v1162 = vadd.s32 %v1114, 2147483648
    %vm1164 = vcmp.ge.s32.totalorder %v1162, 858993459
    %v1165 = vadd.s32 %v1115, 2147483648
    %vm1167 = vcmp.ge.s32.totalorder %v1165, 858993459
    %v1168 = vadd.s32 %v1116, 2147483648
    %vm1170 = vcmp.ge.s32.totalorder %v1168, 858993459
    %v1171 = vadd.s32 %v1117, 2147483648
    %vm1173 = vcmp.ge.s32.totalorder %v1171, 858993459
    %v1174 = vadd.s32 %v1118, 2147483648
    %vm1176 = vcmp.ge.s32.totalorder %v1174, 858993459
    %v1177 = vadd.s32 %v1119, 2147483648
    %vm1179 = vcmp.ge.s32.totalorder %v1177, 858993459
    %v1180 = vadd.s32 %v1120, 2147483648
    %vm1182 = vcmp.ge.s32.totalorder %v1180, 858993459
    %v1183 = vadd.s32 %v1121, 2147483648
    %vm1185 = vcmp.ge.s32.totalorder %v1183, 858993459
    %v1186 = vadd.s32 %v1122, 2147483648
    %vm1188 = vcmp.ge.s32.totalorder %v1186, 858993459
    %v1189 = vadd.s32 %v1123, 2147483648
    %vm1191 = vcmp.ge.s32.totalorder %v1189, 858993459
    %v1192 = vadd.s32 %v1124, 2147483648
    %vm1194 = vcmp.ge.s32.totalorder %v1192, 858993459
    %v1195 = vadd.s32 %v1125, 2147483648
    %vm1197 = vcmp.ge.s32.totalorder %v1195, 858993459
    %v1198 = vadd.s32 %v1126, 2147483648
    %vm1200 = vcmp.ge.s32.totalorder %v1198, 858993459
    %v1201 = vadd.s32 %v1127, 2147483648
    %vm1203 = vcmp.ge.s32.totalorder %v1201, 858993459
    %v1204 = vadd.s32 %v1128, 2147483648
    %vm1206 = vcmp.ge.s32.totalorder %v1204, 858993459
    %v1207 = vadd.s32 %v1129, 2147483648
    %vm1209 = vcmp.ge.s32.totalorder %v1207, 858993459
    %v1210 = vadd.s32 %v1130, 2147483648
    %vm1212 = vcmp.ge.s32.totalorder %v1210, 858993459
    %v1213 = vadd.s32 %v1131, 2147483648
    %vm1215 = vcmp.ge.s32.totalorder %v1213, 858993459
    %v1216 = vadd.s32 %v1132, 2147483648
    %vm1218 = vcmp.ge.s32.totalorder %v1216, 858993459
    %v1219 = vadd.s32 %v1133, 2147483648
    %vm1221 = vcmp.ge.s32.totalorder %v1219, 858993459
    %v1222 = vadd.s32 %v1134, 2147483648
    %vm1224 = vcmp.ge.s32.totalorder %v1222, 858993459
    %v1225 = vadd.s32 %v1135, 2147483648
    %vm1227 = vcmp.ge.s32.totalorder %v1225, 858993459
    %v1228 = vadd.s32 %v1136, 2147483648
    %vm1230 = vcmp.ge.s32.totalorder %v1228, 858993459
    %v1231 = vadd.s32 %v1137, 2147483648
    %vm1233 = vcmp.ge.s32.totalorder %v1231, 858993459
    %v1234 = vmul.f32 %v499, %v640
    %v1235 = vmul.f32 %v501, %v655
    %v1236 = vmul.f32 %v503, %v670
    %v1237 = vmul.f32 %v505, %v685
    %v1238 = vmul.f32 %v507, %v700
    %v1239 = vmul.f32 %v509, %v715
    %v1240 = vmul.f32 %v511, %v730
    %v1241 = vmul.f32 %v513, %v745
    %v1242 = vmul.f32 %v515, %v760
    %v1243 = vmul.f32 %v517, %v775
    %v1244 = vmul.f32 %v519, %v790
    %v1245 = vmul.f32 %v521, %v805
    %v1246 = vmul.f32 %v523, %v820
    %v1247 = vmul.f32 %v525, %v835
    %v1248 = vmul.f32 %v527, %v850
    %v1249 = vmul.f32 %v529, %v865
    %v1250 = vmul.f32 %v531, %v880
    %v1251 = vmul.f32 %v533, %v895
    %v1252 = vmul.f32 %v535, %v910
    %v1253 = vmul.f32 %v537, %v925
    %v1254 = vmul.f32 %v539, %v940
    %v1255 = vmul.f32 %v541, %v955
    %v1256 = vmul.f32 %v543, %v970
    %v1257 = vmul.f32 %v545, %v985
    %v1258 = vmul.f32 %v547, %v1000
    %v1259 = vmul.f32 %v549, %v1015
    %v1260 = vmul.f32 %v551, %v1030
    %v1261 = vmul.f32 %v553, %v1045
    %v1262 = vmul.f32 %v555, %v1060
    %v1263 = vmul.f32 %v557, %v1075
    %v1264 = vmul.f32 %v559, %v1090
    %v1265 = vmul.f32 %v561, %v1105
    %v1266 = vsel %vm1140, %v1234, 0.0
    %v1267 = vsel %vm1143, %v1235, 0.0
    %v1268 = vsel %vm1146, %v1236, 0.0
    %v1269 = vsel %vm1149, %v1237, 0.0
    %v1270 = vsel %vm1152, %v1238, 0.0
    %v1271 = vsel %vm1155, %v1239, 0.0
    %v1272 = vsel %vm1158, %v1240, 0.0
    %v1273 = vsel %vm1161, %v1241, 0.0
    %v1274 = vsel %vm1164, %v1242, 0.0
    %v1275 = vsel %vm1167, %v1243, 0.0
    %v1276 = vsel %vm1170, %v1244, 0.0
    %v1277 = vsel %vm1173, %v1245, 0.0
    %v1278 = vsel %vm1176, %v1246, 0.0
    %v1279 = vsel %vm1179, %v1247, 0.0
    %v1280 = vsel %vm1182, %v1248, 0.0
    %v1281 = vsel %vm1185, %v1249, 0.0
    %v1282 = vsel %vm1188, %v1250, 0.0
    %v1283 = vsel %vm1191, %v1251, 0.0
    %v1284 = vsel %vm1194, %v1252, 0.0
    %v1285 = vsel %vm1197, %v1253, 0.0
    %v1286 = vsel %vm1200, %v1254, 0.0
    %v1287 = vsel %vm1203, %v1255, 0.0
    %v1288 = vsel %vm1206, %v1256, 0.0
    %v1289 = vsel %vm1209, %v1257, 0.0
    %v1290 = vsel %vm1212, %v1258, 0.0
    %v1291 = vsel %vm1215, %v1259, 0.0
    %v1292 = vsel %vm1218, %v1260, 0.0
    %v1293 = vsel %vm1221, %v1261, 0.0
    %v1294 = vsel %vm1224, %v1262, 0.0
    %v1295 = vsel %vm1227, %v1263, 0.0
    %v1296 = vsel %vm1230, %v1264, 0.0
    %v1297 = vsel %vm1233, %v1265, 0.0
    %1298 = vmatpush.msra.mxu0 %v239
    %1299 = vmatpush.msra.mxu0 %v236
    %1300 = vmatpush.msra.mxu0 %v233
    %1301 = vmatpush.msra.mxu0 %v230
    %1302 = vmatpush.msra.mxu0 %v227
    %1303 = vmatpush.msra.mxu0 %v224
    %1304 = vmatpush.msra.mxu0 %v221
    %1305 = vmatpush.msra.mxu0 %v218
    %1306 = vmatpush.msra.mxu0 %v215
    %1307 = vmatpush.msra.mxu0 %v212
    %1308 = vmatpush.msra.mxu0 %v209
    %1309 = vmatpush.msra.mxu0 %v206
    %1310 = vmatpush.msra.mxu0 %v203
    %1311 = vmatpush.msra.mxu0 %v200
    %1312 = vmatpush.msra.mxu0 %v197
    %1313 = vmatpush.msra.mxu0 %v194
    %1314 = vmatmul.f32.gmra.mxu0 %v1266
    %v1315 = vpop.f32.mrf.mxu0
    %v1316 = vadd.f32 0.0, %v1315
    %1317 = vmatmul.f32.gmra.mxu0 %v1267
    %v1318 = vpop.f32.mrf.mxu0
    %v1319 = vadd.f32 0.0, %v1318
    %1320 = vmatmul.f32.gmra.mxu0 %v1268
    %v1321 = vpop.f32.mrf.mxu0
    %v1322 = vadd.f32 0.0, %v1321
    %1323 = vmatmul.f32.gmra.mxu0 %v1269
    %v1324 = vpop.f32.mrf.mxu0
    %v1325 = vadd.f32 0.0, %v1324
    %1326 = vmatmul.f32.gmra.mxu0 %v1270
    %v1327 = vpop.f32.mrf.mxu0
    %v1328 = vadd.f32 0.0, %v1327
    %1329 = vmatmul.f32.gmra.mxu0 %v1271
    %v1330 = vpop.f32.mrf.mxu0
    %v1331 = vadd.f32 0.0, %v1330
    %1332 = vmatmul.f32.gmra.mxu0 %v1272
    %v1333 = vpop.f32.mrf.mxu0
    %v1334 = vadd.f32 0.0, %v1333
    %1335 = vmatmul.f32.gmra.mxu0 %v1273
    %v1336 = vpop.f32.mrf.mxu0
    %v1337 = vadd.f32 0.0, %v1336
    %1338 = vmatmul.f32.gmra.mxu0 %v1274
    %v1339 = vpop.f32.mrf.mxu0
    %v1340 = vadd.f32 0.0, %v1339
    %1341 = vmatmul.f32.gmra.mxu0 %v1275
    %v1342 = vpop.f32.mrf.mxu0
    %v1343 = vadd.f32 0.0, %v1342
    %1344 = vmatmul.f32.gmra.mxu0 %v1276
    %v1345 = vpop.f32.mrf.mxu0
    %v1346 = vadd.f32 0.0, %v1345
    %1347 = vmatmul.f32.gmra.mxu0 %v1277
    %v1348 = vpop.f32.mrf.mxu0
    %v1349 = vadd.f32 0.0, %v1348
    %1350 = vmatmul.f32.gmra.mxu0 %v1278
    %v1351 = vpop.f32.mrf.mxu0
    %v1352 = vadd.f32 0.0, %v1351
    %1353 = vmatmul.f32.gmra.mxu0 %v1279
    %v1354 = vpop.f32.mrf.mxu0
    %v1355 = vadd.f32 0.0, %v1354
    %1356 = vmatmul.f32.gmra.mxu0 %v1280
    %v1357 = vpop.f32.mrf.mxu0
    %v1358 = vadd.f32 0.0, %v1357
    %1359 = vmatmul.f32.gmra.mxu0 %v1281
    %v1360 = vpop.f32.mrf.mxu0
    %v1361 = vadd.f32 0.0, %v1360
    %1362 = vdwg.mxu0
    %1363 = vmatpush.msra.mxu0 %v400
    %1364 = vmatpush.msra.mxu0 %v397
    %1365 = vmatpush.msra.mxu0 %v394
    %1366 = vmatpush.msra.mxu0 %v391
    %1367 = vmatpush.msra.mxu0 %v388
    %1368 = vmatpush.msra.mxu0 %v385
    %1369 = vmatpush.msra.mxu0 %v382
    %1370 = vmatpush.msra.mxu0 %v379
    %1371 = vmatpush.msra.mxu0 %v376
    %1372 = vmatpush.msra.mxu0 %v373
    %1373 = vmatpush.msra.mxu0 %v370
    %1374 = vmatpush.msra.mxu0 %v367
    %1375 = vmatpush.msra.mxu0 %v364
    %1376 = vmatpush.msra.mxu0 %v361
    %1377 = vmatpush.msra.mxu0 %v358
    %1378 = vmatpush.msra.mxu0 %v355
    %1379 = vmatmul.f32.gmra.mxu0 %v1282
    %v1380 = vpop.f32.mrf.mxu0
    %v1381 = vadd.f32 0.0, %v1380
    %1382 = vmatmul.f32.gmra.mxu0 %v1283
    %v1383 = vpop.f32.mrf.mxu0
    %v1384 = vadd.f32 0.0, %v1383
    %1385 = vmatmul.f32.gmra.mxu0 %v1284
    %v1386 = vpop.f32.mrf.mxu0
    %v1387 = vadd.f32 0.0, %v1386
    %1388 = vmatmul.f32.gmra.mxu0 %v1285
    %v1389 = vpop.f32.mrf.mxu0
    %v1390 = vadd.f32 0.0, %v1389
    %1391 = vmatmul.f32.gmra.mxu0 %v1286
    %v1392 = vpop.f32.mrf.mxu0
    %v1393 = vadd.f32 0.0, %v1392
    %1394 = vmatmul.f32.gmra.mxu0 %v1287
    %v1395 = vpop.f32.mrf.mxu0
    %v1396 = vadd.f32 0.0, %v1395
    %1397 = vmatmul.f32.gmra.mxu0 %v1288
    %v1398 = vpop.f32.mrf.mxu0
    %v1399 = vadd.f32 0.0, %v1398
    %1400 = vmatmul.f32.gmra.mxu0 %v1289
    %v1401 = vpop.f32.mrf.mxu0
    %v1402 = vadd.f32 0.0, %v1401
    %1403 = vmatmul.f32.gmra.mxu0 %v1290
    %v1404 = vpop.f32.mrf.mxu0
    %v1405 = vadd.f32 0.0, %v1404
    %1406 = vmatmul.f32.gmra.mxu0 %v1291
    %v1407 = vpop.f32.mrf.mxu0
    %v1408 = vadd.f32 0.0, %v1407
    %1409 = vmatmul.f32.gmra.mxu0 %v1292
    %v1410 = vpop.f32.mrf.mxu0
    %v1411 = vadd.f32 0.0, %v1410
    %1412 = vmatmul.f32.gmra.mxu0 %v1293
    %v1413 = vpop.f32.mrf.mxu0
    %v1414 = vadd.f32 0.0, %v1413
    %1415 = vmatmul.f32.gmra.mxu0 %v1294
    %v1416 = vpop.f32.mrf.mxu0
    %v1417 = vadd.f32 0.0, %v1416
    %1418 = vmatmul.f32.gmra.mxu0 %v1295
    %v1419 = vpop.f32.mrf.mxu0
    %v1420 = vadd.f32 0.0, %v1419
    %1421 = vmatmul.f32.gmra.mxu0 %v1296
    %v1422 = vpop.f32.mrf.mxu0
    %v1423 = vadd.f32 0.0, %v1422
    %1424 = vmatmul.f32.gmra.mxu0 %v1297
    %v1425 = vpop.f32.mrf.mxu0
    %v1426 = vadd.f32 0.0, %v1425
    %1427 = vdwg.mxu0
    %1428 = vst [vmem:[#allocation2] sm:$0xff] %v1316
    %1429 = vst [vmem:[#allocation2 + $0x8] sm:$0xff] %v1319
    %1430 = vst [vmem:[#allocation2 + $0x10] sm:$0xff] %v1322
    %1431 = vst [vmem:[#allocation2 + $0x18] sm:$0xff] %v1325
    %1432 = vst [vmem:[#allocation2 + $0x20] sm:$0xff] %v1328
    %1433 = vst [vmem:[#allocation2 + $0x28] sm:$0xff] %v1331
    %1434 = vst [vmem:[#allocation2 + $0x30] sm:$0xff] %v1334
    %1435 = vst [vmem:[#allocation2 + $0x38] sm:$0xff] %v1337
    %1436 = vst [vmem:[#allocation2 + $0x40] sm:$0xff] %v1340
    %1437 = vst [vmem:[#allocation2 + $0x48] sm:$0xff] %v1343
    %1438 = vst [vmem:[#allocation2 + $0x50] sm:$0xff] %v1346
    %1439 = vst [vmem:[#allocation2 + $0x58] sm:$0xff] %v1349
    %1440 = vst [vmem:[#allocation2 + $0x60] sm:$0xff] %v1352
    %1441 = vst [vmem:[#allocation2 + $0x68] sm:$0xff] %v1355
    %1442 = vst [vmem:[#allocation2 + $0x70] sm:$0xff] %v1358
    %1443 = vst [vmem:[#allocation2 + $0x78] sm:$0xff] %v1361
    %1444 = vst [vmem:[#allocation2 + $0x80] sm:$0xff] %v1381
    %1445 = vst [vmem:[#allocation2 + $0x88] sm:$0xff] %v1384
    %1446 = vst [vmem:[#allocation2 + $0x90] sm:$0xff] %v1387
    %1447 = vst [vmem:[#allocation2 + $0x98] sm:$0xff] %v1390
    %1448 = vst [vmem:[#allocation2 + $0xa0] sm:$0xff] %v1393
    %1449 = vst [vmem:[#allocation2 + $0xa8] sm:$0xff] %v1396
    %1450 = vst [vmem:[#allocation2 + $0xb0] sm:$0xff] %v1399
    %1451 = vst [vmem:[#allocation2 + $0xb8] sm:$0xff] %v1402
    %1452 = vst [vmem:[#allocation2 + $0xc0] sm:$0xff] %v1405
    %1453 = vst [vmem:[#allocation2 + $0xc8] sm:$0xff] %v1408
    %1454 = vst [vmem:[#allocation2 + $0xd0] sm:$0xff] %v1411
    %1455 = vst [vmem:[#allocation2 + $0xd8] sm:$0xff] %v1414
    %1456 = vst [vmem:[#allocation2 + $0xe0] sm:$0xff] %v1417
    %1457 = vst [vmem:[#allocation2 + $0xe8] sm:$0xff] %v1420
    %1458 = vst [vmem:[#allocation2 + $0xf0] sm:$0xff] %v1423
    %1459 = vst [vmem:[#allocation2 + $0xf8] sm:$0xff] %v1426
    // Predicated region
    $region14: #{tpu_custom_call.1} parent=1 // pred_check
      _
    $region15: #{tpu_custom_call.1} parent=1 // pred_check_branch
      %1461 = sbr.rel (0) target = $region17
    $region16: #{tpu_custom_call.1} parent=1 // pred_region
      %1463 = vsyncadd [#allocation3], 0
      %s1464 = sshll.u32 [#allocation2], 4
      %s1465 = int_to_ptr.vmem [resolvable:$true] %s1464
      %s1466 = sshll.u32 %s3, 4
      %s1467 = int_to_ptr.hbm [resolvable:$true] %s1466
      %1472 = dma.vmem_to_hbm [thread:$0]  %s1465, 4096, %s1467, [#allocation3], 128, 128, 8
    $region17: #{tpu_custom_call.1} parent=1 // pred_fallthru
      _
    // Predicated region
    $region18: #{tpu_custom_call.1} parent=1 // pred_check
      _
    $region19: #{tpu_custom_call.1} parent=1 // pred_check_branch
      %1474 = sbr.rel (0) target = $region21
    $region20: #{tpu_custom_call.1} parent=1 // pred_region
      %1476 = dma.done [#allocation3], 4096
    $region21: #{tpu_custom_call.1} parent=1 // pred_fallthru
      _
    %1477 = vsyncpa [#allocation3], 1

</llo_original>
